<compile_context>
chip_gen: v5e
topology: v5e:2x2
jax: 0.10.0
libtpu: 0.0.40
codegen_flags: <defaults>
</compile_context>

<pallas_src>
import numpy as np
import jax
import jax.numpy as jnp
from jax import lax
from jax.experimental import pallas as pl
from jax.experimental.pallas import tpu as pltpu

# dot_general dimension numbers for "contract the leading (node) axis of both
# operands", i.e. lhs^T @ rhs without an explicit transpose op.
_TN = (((0,), (0,)), ((), ()))


def _attention_edge_kernel(x_ref, w_ref, adj_ref, amat_ref, sel_ref, dd_ref,
                           eeo_ref, pmt_ref, out_ref):
    f32 = jnp.float32
    X = x_ref[0]             # (N, Fin)
    W = w_ref[...]           # (Fin, F)
    A = adj_ref[0]           # (N, M)
    a_mat = amat_ref[...]    # (F, 2): columns [a[:F], a[F:]]

    # H = X @ W   (MXU, f32 accumulation)
    H = jnp.dot(X, W, preferred_element_type=f32)                      # (N, F)

    # ---- factored edge scores: a_input (N, M, 2F) is never materialized ----
    # p_c[n] = H[n] . a_c                                   -> PH (N, 2)
    # q_c[m] = Em[m] . a_c = (sum_n A[n,m] p_c[n]) / deg[m] -> Q  (2, M)
    PH = jnp.dot(H, a_mat, preferred_element_type=f32)                 # (N, 2)
    QR = lax.dot_general(PH, A, _TN, preferred_element_type=f32)       # (2, M)
    deg = jnp.sum(A, axis=0, keepdims=True)                            # (1, M)
    deg = jnp.where(deg == 0.0, 1.0, deg)
    Q = QR * pl.reciprocal(deg, approx=True)                           # (2, M)

    # Even/odd node scores: PHe[n] = PH[2n], PHo[n] = PH[2n+1] (zero if out of range)
    PHe = jnp.dot(eeo_ref[0], PH, preferred_element_type=f32)          # (N, 2)
    PHo = jnp.dot(eeo_ref[1], PH, preferred_element_type=f32)          # (N, 2)

    # Lane permutations of the edge scores:
    #   q1p[m] = q1[(2m) % M],   q2p[m] = q2[(2m+1) % M]
    q1p = jnp.dot(Q[0:1, :], pmt_ref[0], preferred_element_type=f32)   # (1, M)
    q2p = jnp.dot(Q[1:2, :], pmt_ref[1], preferred_element_type=f32)   # (1, M)

    d1 = dd_ref[0:1, :]      # (1, M) in {0,1}
    d2 = dd_ref[1:2, :]
    sel1 = sel_ref[0]        # (N, M) in {0,1}: 1 -> this a_input half comes from H
    sel2 = sel_ref[1]

    # e[n,m] = a_input[n,m,:] . a, reproducing the exact torch cat(dim=1)+view layout:
    #   first half  = C[2r],  second half = C[2r+1],  r = n*M+m,
    #   C[k] = H[k // M] if k < N*M else Em[k % M].
    tH1 = PHe[:, 0:1] * (1.0 - d1) + PHo[:, 0:1] * d1                  # (N, M)
    tH2 = PHe[:, 1:2] * (1.0 - d2) + PHo[:, 1:2] * d2                  # (N, M)
    e = (sel1 * tH1 + (1.0 - sel1) * q1p +
         sel2 * tH2 + (1.0 - sel2) * q2p)

    # LeakyReLU (negative_slope = 0.01, the nn.LeakyReLU() default)
    e = jnp.where(e > 0.0, e, 0.01 * e)

    # Masked softmax over the edge (lane) axis
    att = jnp.where(A > 0.0, e, jnp.float32(-1e12))
    att = att - jnp.max(att, axis=-1, keepdims=True)
    p = jnp.exp(att)
    att = p * pl.reciprocal(jnp.sum(p, axis=-1, keepdims=True), approx=True)

    # h_prime = attention^T @ H   (MXU)
    out_ref[0] = lax.dot_general(att, H, _TN, preferred_element_type=f32)


@jax.jit
def attention_edge_layer(X, A, W, a):
    B, N, Fin = X.shape
    M = A.shape[2]
    Fout = W.shape[1]

    X = X.astype(jnp.float32)
    A = A.astype(jnp.float32)
    W = W.astype(jnp.float32)
    a = a.astype(jnp.float32)

    # a split into the two half-vectors that dot the first / second half of each
    # a_input row:  a_mat[:, 0] = a[:Fout, 0],  a_mat[:, 1] = a[Fout:, 0]
    a_mat = jnp.concatenate([a[:Fout], a[Fout:]], axis=1)              # (Fout, 2)

    # ---- trace-time constants encoding the exact cat(dim=1)+view interleaving ----
    # a_input[n, m, :F] = C[2r], a_input[n, m, F:] = C[2r+1], r = n*M + m,
    # C[k] = H[k // M] for k < N*M else Em[k % M].
    r = np.arange(N * M, dtype=np.int64).reshape(N, M)
    sel1 = (2 * r < N * M).astype(np.float32)            # first half comes from H
    sel2 = (2 * r + 1 < N * M).astype(np.float32)        # second half comes from H
    m_idx = np.arange(M, dtype=np.int64)
    d1 = ((2 * m_idx) // M).astype(np.float32)           # H index = 2n + d1(m)
    d2 = ((2 * m_idx + 1) // M).astype(np.float32)       # H index = 2n + d2(m)
    EE = np.zeros((N, N), np.float32)                    # PHe = EE @ PH (row 2n)
    EO = np.zeros((N, N), np.float32)                    # PHo = EO @ PH (row 2n+1)
    for n in range(N):
        if 2 * n < N:
            EE[n, 2 * n] = 1.0
        if 2 * n + 1 < N:
            EO[n, 2 * n + 1] = 1.0
    PM1 = np.zeros((M, M), np.float32)                   # q1p = q1_row @ PM1
    PM2 = np.zeros((M, M), np.float32)                   # q2p = q2_row @ PM2
    for m in range(M):
        PM1[(2 * m) % M, m] = 1.0
        PM2[(2 * m + 1) % M, m] = 1.0

    SEL = jnp.asarray(np.stack([sel1, sel2]))            # (2, N, M)
    DD = jnp.asarray(np.stack([d1, d2]))                 # (2, M)
    EEO = jnp.asarray(np.stack([EE, EO]))                # (2, N, N)
    PMT = jnp.asarray(np.stack([PM1, PM2]))              # (2, M, M)

    return pl.pallas_call(
        _attention_edge_kernel,
        out_shape=jax.ShapeDtypeStruct((B, M, Fout), jnp.float32),
        grid=(B,),
        in_specs=[
            pl.BlockSpec((1, N, Fin), lambda b: (b, 0, 0)),     # X
            pl.BlockSpec((Fin, Fout), lambda b: (0, 0)),        # W
            pl.BlockSpec((1, N, M), lambda b: (b, 0, 0)),       # A
            pl.BlockSpec((Fout, 2), lambda b: (0, 0)),          # a_mat
            pl.BlockSpec((2, N, M), lambda b: (0, 0, 0)),       # SEL
            pl.BlockSpec((2, M), lambda b: (0, 0)),             # DD
            pl.BlockSpec((2, N, N), lambda b: (0, 0, 0)),       # EEO
            pl.BlockSpec((2, M, M), lambda b: (0, 0, 0)),       # PMT
        ],
        out_specs=pl.BlockSpec((1, M, Fout), lambda b: (b, 0, 0)),
        compiler_params=pltpu.CompilerParams(
            dimension_semantics=("parallel",)),
    )(X, W, A, a_mat, SEL, DD, EEO, PMT)


def reference(X, A, W, a):
    """Pure-JAX transcription of the PyTorch forward (for correctness check)."""
    hp = jax.lax.Precision.HIGHEST
    H = jnp.matmul(X, W, precision=hp)
    B, N, M = A.shape
    Fout = W.shape[1]
    degree = jnp.sum(A, axis=1)[..., None]
    degree = jnp.where(degree == 0, 1.0, degree)
    Em = jnp.matmul(jnp.transpose(A, (0, 2, 1)), H, precision=hp) / degree
    a_input = jnp.concatenate(
        [jnp.tile(H, (1, 1, M)).reshape(B, N * M, -1),
         jnp.tile(Em, (1, N, 1))], axis=1).reshape(B, N, M, 2 * Fout)
    e = jnp.matmul(a_input, a, precision=hp)[..., 0]
    e = jnp.where(e > 0, e, 0.01 * e)                      # LeakyReLU(0.01)
    attention = jnp.where(A > 0, e, -1e12)
    attention = jax.nn.softmax(attention, axis=2)
    h_prime = jnp.matmul(jnp.transpose(attention, (0, 2, 1)), H, precision=hp)
    return h_prime


if __name__ == "__main__":
    B, N, M = 2, 8, 6
    in_features, out_features = 16, 8

    key = jax.random.PRNGKey(0)
    kx, ka, kw, kat = jax.random.split(key, 4)

    X = jax.random.normal(kx, (B, N, in_features), dtype=jnp.float32)
    A = (jax.random.uniform(ka, (B, N, M)) > 0.5).astype(jnp.float32)

    # Deterministic xavier_uniform_(gain=1.414) equivalents for W and a.
    gain = 1.414
    w_bound = gain * float(np.sqrt(6.0 / (in_features + out_features)))
    W = jax.random.uniform(kw, (in_features, out_features), dtype=jnp.float32,
                           minval=-w_bound, maxval=w_bound)
    a_bound = gain * float(np.sqrt(6.0 / (2 * out_features + 1)))
    a = jax.random.uniform(kat, (2 * out_features, 1), dtype=jnp.float32,
                           minval=-a_bound, maxval=a_bound)

    out = attention_edge_layer(X, A, W, a)
    out = jax.block_until_ready(out)

    ref = reference(X, A, W, a)
    # 2e-2 tolerance accounts for the EUP fast-reciprocal path (approx=True); the
    # rest of the kernel is pure f32 with f32 MXU accumulation.
    np.testing.assert_allclose(np.asarray(out), np.asarray(ref),
                               rtol=2e-2, atol=2e-2)
    print("KERNEL_OK")
</pallas_src>

<mosaic_0001>
module attributes {stable_mosaic.version = 11 : i64} {
  func.func @_attention_edge_kernel(%arg0: i32, %arg1: memref<1x8x16xf32, #tpu.memory_space<vmem>>, %arg2: memref<16x8xf32, #tpu.memory_space<vmem>>, %arg3: memref<1x8x6xf32, #tpu.memory_space<vmem>>, %arg4: memref<8x2xf32, #tpu.memory_space<vmem>>, %arg5: memref<2x8x6xf32, #tpu.memory_space<vmem>>, %arg6: memref<2x6xf32, #tpu.memory_space<vmem>>, %arg7: memref<2x8x8xf32, #tpu.memory_space<vmem>>, %arg8: memref<2x6x6xf32, #tpu.memory_space<vmem>>, %arg9: memref<1x6x8xf32, #tpu.memory_space<vmem>>) attributes {dimension_semantics = [#tpu.dimension_semantics<parallel>], iteration_bounds = array<i64: 2>, scalar_prefetch = 0 : i64, scratch_operands = 0 : i64, tpu.core_type = #tpu.core_type<tc>, window_params = [{transform_indices = @transform_0, window_bounds = array<i64: 1, 8, 16>}, {pipeline_mode = #tpu.pipeline_mode<synchronous>, transform_indices = @transform_1, window_bounds = array<i64: 16, 8>}, {transform_indices = @transform_2, window_bounds = array<i64: 1, 8, 6>}, {pipeline_mode = #tpu.pipeline_mode<synchronous>, transform_indices = @transform_3, window_bounds = array<i64: 8, 2>}, {pipeline_mode = #tpu.pipeline_mode<synchronous>, transform_indices = @transform_4, window_bounds = array<i64: 2, 8, 6>}, {pipeline_mode = #tpu.pipeline_mode<synchronous>, transform_indices = @transform_5, window_bounds = array<i64: 2, 6>}, {pipeline_mode = #tpu.pipeline_mode<synchronous>, transform_indices = @transform_6, window_bounds = array<i64: 2, 8, 8>}, {pipeline_mode = #tpu.pipeline_mode<synchronous>, transform_indices = @transform_7, window_bounds = array<i64: 2, 6, 6>}, {transform_indices = @transform_8, window_bounds = array<i64: 1, 6, 8>}]} {
    %c0 = arith.constant 0 : index
    %c0_0 = arith.constant 0 : index
    %c0_1 = arith.constant 0 : index
    %0 = vector.load %arg1[%c0, %c0_0, %c0_1] : memref<1x8x16xf32, #tpu.memory_space<vmem>>, vector<1x8x16xf32>
    %1 = vector.shape_cast %0 : vector<1x8x16xf32> to vector<8x16xf32>
    %c0_2 = arith.constant 0 : index
    %c0_3 = arith.constant 0 : index
    %2 = vector.load %arg2[%c0_2, %c0_3] : memref<16x8xf32, #tpu.memory_space<vmem>>, vector<16x8xf32>
    %c0_4 = arith.constant 0 : index
    %c0_5 = arith.constant 0 : index
    %c0_6 = arith.constant 0 : index
    %3 = vector.load %arg3[%c0_4, %c0_5, %c0_6] : memref<1x8x6xf32, #tpu.memory_space<vmem>>, vector<1x8x6xf32>
    %4 = vector.shape_cast %3 : vector<1x8x6xf32> to vector<8x6xf32>
    %c0_7 = arith.constant 0 : index
    %c0_8 = arith.constant 0 : index
    %5 = vector.load %arg4[%c0_7, %c0_8] : memref<8x2xf32, #tpu.memory_space<vmem>>, vector<8x2xf32>
    %cst = arith.constant dense<0.000000e+00> : vector<8x8xf32>
    %6 = tpu.matmul %1, %2, %cst {dimension_numbers = #tpu.dot_dimension_numbers<[1], [0], [0], [1], [0, 0, 1, 1], [], []>} : vector<8x16xf32>, vector<16x8xf32>, vector<8x8xf32> -> vector<8x8xf32>
    %cst_9 = arith.constant dense<0.000000e+00> : vector<8x2xf32>
    %7 = tpu.matmul %6, %5, %cst_9 {dimension_numbers = #tpu.dot_dimension_numbers<[1], [0], [0], [1], [0, 0, 1, 1], [], []>} : vector<8x8xf32>, vector<8x2xf32>, vector<8x2xf32> -> vector<8x2xf32>
    %cst_10 = arith.constant dense<0.000000e+00> : vector<2x6xf32>
    %8 = tpu.matmul %7, %4, %cst_10 {dimension_numbers = #tpu.dot_dimension_numbers<[0], [0], [1], [1], [0, 1, 1, 1], [], []>} : vector<8x2xf32>, vector<8x6xf32>, vector<2x6xf32> -> vector<2x6xf32>
    %cst_11 = arith.constant dense<0.000000e+00> : vector<6xf32>
    %9 = vector.multi_reduction <add>, %4, %cst_11 [0] : vector<8x6xf32> to vector<6xf32>
    %10 = vector.shape_cast %9 : vector<6xf32> to vector<1x6xf32>
    %cst_12 = arith.constant 0.000000e+00 : f32
    %11 = vector.broadcast %cst_12 : f32 to vector<1x6xf32>
    %12 = arith.cmpf oeq, %10, %11 : vector<1x6xf32>
    %cst_13 = arith.constant 1.000000e+00 : f32
    %13 = vector.broadcast %cst_13 : f32 to vector<1x6xf32>
    %14 = arith.select %12, %13, %10 : vector<1x6xi1>, vector<1x6xf32>
    %15 = tpu.reciprocal %14 {approx = true} : vector<1x6xf32> -> vector<1x6xf32>
    %16 = vector.broadcast %15 : vector<1x6xf32> to vector<2x6xf32>
    %17 = arith.mulf %8, %16 : vector<2x6xf32>
    %c0_14 = arith.constant 0 : index
    %c0_15 = arith.constant 0 : index
    %c0_16 = arith.constant 0 : index
    %18 = vector.load %arg7[%c0_14, %c0_15, %c0_16] : memref<2x8x8xf32, #tpu.memory_space<vmem>>, vector<1x8x8xf32>
    %19 = vector.shape_cast %18 : vector<1x8x8xf32> to vector<8x8xf32>
    %cst_17 = arith.constant dense<0.000000e+00> : vector<8x2xf32>
    %20 = tpu.matmul %19, %7, %cst_17 {dimension_numbers = #tpu.dot_dimension_numbers<[1], [0], [0], [1], [0, 0, 1, 1], [], []>} : vector<8x8xf32>, vector<8x2xf32>, vector<8x2xf32> -> vector<8x2xf32>
    %c1 = arith.constant 1 : index
    %c0_18 = arith.constant 0 : index
    %c0_19 = arith.constant 0 : index
    %21 = vector.load %arg7[%c1, %c0_18, %c0_19] : memref<2x8x8xf32, #tpu.memory_space<vmem>>, vector<1x8x8xf32>
    %22 = vector.shape_cast %21 : vector<1x8x8xf32> to vector<8x8xf32>
    %cst_20 = arith.constant dense<0.000000e+00> : vector<8x2xf32>
    %23 = tpu.matmul %22, %7, %cst_20 {dimension_numbers = #tpu.dot_dimension_numbers<[1], [0], [0], [1], [0, 0, 1, 1], [], []>} : vector<8x8xf32>, vector<8x2xf32>, vector<8x2xf32> -> vector<8x2xf32>
    %24 = vector.extract_strided_slice %17 {offsets = [0, 0], sizes = [1, 6], strides = [1, 1]} : vector<2x6xf32> to vector<1x6xf32>
    %c0_21 = arith.constant 0 : index
    %c0_22 = arith.constant 0 : index
    %c0_23 = arith.constant 0 : index
    %25 = vector.load %arg8[%c0_21, %c0_22, %c0_23] : memref<2x6x6xf32, #tpu.memory_space<vmem>>, vector<1x6x6xf32>
    %26 = vector.shape_cast %25 : vector<1x6x6xf32> to vector<6x6xf32>
    %cst_24 = arith.constant dense<0.000000e+00> : vector<1x6xf32>
    %27 = tpu.matmul %24, %26, %cst_24 {dimension_numbers = #tpu.dot_dimension_numbers<[1], [0], [0], [1], [0, 0, 1, 1], [], []>} : vector<1x6xf32>, vector<6x6xf32>, vector<1x6xf32> -> vector<1x6xf32>
    %28 = vector.extract_strided_slice %17 {offsets = [1, 0], sizes = [1, 6], strides = [1, 1]} : vector<2x6xf32> to vector<1x6xf32>
    %c1_25 = arith.constant 1 : index
    %c0_26 = arith.constant 0 : index
    %c0_27 = arith.constant 0 : index
    %29 = vector.load %arg8[%c1_25, %c0_26, %c0_27] : memref<2x6x6xf32, #tpu.memory_space<vmem>>, vector<1x6x6xf32>
    %30 = vector.shape_cast %29 : vector<1x6x6xf32> to vector<6x6xf32>
    %cst_28 = arith.constant dense<0.000000e+00> : vector<1x6xf32>
    %31 = tpu.matmul %28, %30, %cst_28 {dimension_numbers = #tpu.dot_dimension_numbers<[1], [0], [0], [1], [0, 0, 1, 1], [], []>} : vector<1x6xf32>, vector<6x6xf32>, vector<1x6xf32> -> vector<1x6xf32>
    %c0_29 = arith.constant 0 : index
    %c0_30 = arith.constant 0 : index
    %32 = vector.load %arg6[%c0_29, %c0_30] : memref<2x6xf32, #tpu.memory_space<vmem>>, vector<1x6xf32>
    %c1_31 = arith.constant 1 : index
    %c0_32 = arith.constant 0 : index
    %33 = vector.load %arg6[%c1_31, %c0_32] : memref<2x6xf32, #tpu.memory_space<vmem>>, vector<1x6xf32>
    %c0_33 = arith.constant 0 : index
    %c0_34 = arith.constant 0 : index
    %c0_35 = arith.constant 0 : index
    %34 = vector.load %arg5[%c0_33, %c0_34, %c0_35] : memref<2x8x6xf32, #tpu.memory_space<vmem>>, vector<1x8x6xf32>
    %35 = vector.shape_cast %34 : vector<1x8x6xf32> to vector<8x6xf32>
    %c1_36 = arith.constant 1 : index
    %c0_37 = arith.constant 0 : index
    %c0_38 = arith.constant 0 : index
    %36 = vector.load %arg5[%c1_36, %c0_37, %c0_38] : memref<2x8x6xf32, #tpu.memory_space<vmem>>, vector<1x8x6xf32>
    %37 = vector.shape_cast %36 : vector<1x8x6xf32> to vector<8x6xf32>
    %38 = vector.extract_strided_slice %20 {offsets = [0, 0], sizes = [8, 1], strides = [1, 1]} : vector<8x2xf32> to vector<8x1xf32>
    %cst_39 = arith.constant 1.000000e+00 : f32
    %39 = vector.broadcast %cst_39 : f32 to vector<1x6xf32>
    %40 = arith.subf %39, %32 : vector<1x6xf32>
    %41 = vector.broadcast %38 : vector<8x1xf32> to vector<8x6xf32>
    %42 = vector.broadcast %40 : vector<1x6xf32> to vector<8x6xf32>
    %43 = arith.mulf %41, %42 : vector<8x6xf32>
    %44 = vector.extract_strided_slice %23 {offsets = [0, 0], sizes = [8, 1], strides = [1, 1]} : vector<8x2xf32> to vector<8x1xf32>
    %45 = vector.broadcast %44 : vector<8x1xf32> to vector<8x6xf32>
    %46 = vector.broadcast %32 : vector<1x6xf32> to vector<8x6xf32>
    %47 = arith.mulf %45, %46 : vector<8x6xf32>
    %48 = arith.addf %43, %47 : vector<8x6xf32>
    %49 = vector.extract_strided_slice %20 {offsets = [0, 1], sizes = [8, 1], strides = [1, 1]} : vector<8x2xf32> to vector<8x1xf32>
    %cst_40 = arith.constant 1.000000e+00 : f32
    %50 = vector.broadcast %cst_40 : f32 to vector<1x6xf32>
    %51 = arith.subf %50, %33 : vector<1x6xf32>
    %52 = vector.broadcast %49 : vector<8x1xf32> to vector<8x6xf32>
    %53 = vector.broadcast %51 : vector<1x6xf32> to vector<8x6xf32>
    %54 = arith.mulf %52, %53 : vector<8x6xf32>
    %55 = vector.extract_strided_slice %23 {offsets = [0, 1], sizes = [8, 1], strides = [1, 1]} : vector<8x2xf32> to vector<8x1xf32>
    %56 = vector.broadcast %55 : vector<8x1xf32> to vector<8x6xf32>
    %57 = vector.broadcast %33 : vector<1x6xf32> to vector<8x6xf32>
    %58 = arith.mulf %56, %57 : vector<8x6xf32>
    %59 = arith.addf %54, %58 : vector<8x6xf32>
    %60 = arith.mulf %35, %48 : vector<8x6xf32>
    %cst_41 = arith.constant 1.000000e+00 : f32
    %61 = vector.broadcast %cst_41 : f32 to vector<8x6xf32>
    %62 = arith.subf %61, %35 : vector<8x6xf32>
    %63 = vector.broadcast %27 : vector<1x6xf32> to vector<8x6xf32>
    %64 = arith.mulf %62, %63 : vector<8x6xf32>
    %65 = arith.addf %60, %64 : vector<8x6xf32>
    %66 = arith.mulf %37, %59 : vector<8x6xf32>
    %67 = arith.addf %65, %66 : vector<8x6xf32>
    %cst_42 = arith.constant 1.000000e+00 : f32
    %68 = vector.broadcast %cst_42 : f32 to vector<8x6xf32>
    %69 = arith.subf %68, %37 : vector<8x6xf32>
    %70 = vector.broadcast %31 : vector<1x6xf32> to vector<8x6xf32>
    %71 = arith.mulf %69, %70 : vector<8x6xf32>
    %72 = arith.addf %67, %71 : vector<8x6xf32>
    %cst_43 = arith.constant 0.000000e+00 : f32
    %73 = vector.broadcast %cst_43 : f32 to vector<8x6xf32>
    %74 = arith.cmpf ogt, %72, %73 : vector<8x6xf32>
    %cst_44 = arith.constant 0.00999999977 : f32
    %75 = vector.broadcast %cst_44 : f32 to vector<8x6xf32>
    %76 = arith.mulf %75, %72 : vector<8x6xf32>
    %77 = arith.select %74, %72, %76 : vector<8x6xi1>, vector<8x6xf32>
    %cst_45 = arith.constant 0.000000e+00 : f32
    %78 = vector.broadcast %cst_45 : f32 to vector<8x6xf32>
    %79 = arith.cmpf ogt, %4, %78 : vector<8x6xf32>
    %cst_46 = arith.constant -9.99999995E+11 : f32
    %80 = vector.broadcast %cst_46 : f32 to vector<8x6xf32>
    %81 = arith.select %79, %77, %80 : vector<8x6xi1>, vector<8x6xf32>
    %cst_47 = arith.constant dense<0xFF800000> : vector<8xf32>
    %82 = vector.multi_reduction <maximumf>, %81, %cst_47 [1] : vector<8x6xf32> to vector<8xf32>
    %83 = vector.shape_cast %82 : vector<8xf32> to vector<8x1xf32>
    %84 = vector.broadcast %83 : vector<8x1xf32> to vector<8x6xf32>
    %85 = arith.subf %81, %84 : vector<8x6xf32>
    %86 = math.exp %85 : vector<8x6xf32>
    %cst_48 = arith.constant dense<0.000000e+00> : vector<8xf32>
    %87 = vector.multi_reduction <add>, %86, %cst_48 [1] : vector<8x6xf32> to vector<8xf32>
    %88 = vector.shape_cast %87 : vector<8xf32> to vector<8x1xf32>
    %89 = tpu.reciprocal %88 {approx = true} : vector<8x1xf32> -> vector<8x1xf32>
    %90 = vector.broadcast %89 : vector<8x1xf32> to vector<8x6xf32>
    %91 = arith.mulf %86, %90 : vector<8x6xf32>
    %cst_49 = arith.constant dense<0.000000e+00> : vector<6x8xf32>
    %92 = tpu.matmul %91, %6, %cst_49 {dimension_numbers = #tpu.dot_dimension_numbers<[0], [0], [1], [1], [0, 1, 1, 1], [], []>} : vector<8x6xf32>, vector<8x8xf32>, vector<6x8xf32> -> vector<6x8xf32>
    %c0_50 = arith.constant 0 : index
    %c0_51 = arith.constant 0 : index
    %c0_52 = arith.constant 0 : index
    %93 = vector.load %arg9[%c0_50, %c0_51, %c0_52] : memref<1x6x8xf32, #tpu.memory_space<vmem>>, vector<1x6x8xf32>
    %94 = vector.shape_cast %93 : vector<1x6x8xf32> to vector<6x8xf32>
    %95 = vector.shape_cast %92 : vector<6x8xf32> to vector<1x6x8xf32>
    tpu.vector_store %arg9[%c0_50, %c0_51, %c0_52], %95 {strides = array<i32>} : memref<1x6x8xf32, #tpu.memory_space<vmem>>, vector<1x6x8xf32>,
    return
  }
  func.func @transform_0(%arg0: i32) -> (i32, i32, i32) {
    %c0_i32 = arith.constant 0 : i32
    %c0_i32_0 = arith.constant 0 : i32
    %c0_i32_1 = arith.constant 0 : i32
    return %arg0, %c0_i32, %c0_i32_0 : i32, i32, i32
  }
  func.func @transform_1(%arg0: i32) -> (i32, i32) {
    %c0_i32 = arith.constant 0 : i32
    %c0_i32_0 = arith.constant 0 : i32
    %c0_i32_1 = arith.constant 0 : i32
    return %c0_i32, %c0_i32_0 : i32, i32
  }
  func.func @transform_2(%arg0: i32) -> (i32, i32, i32) {
    %c0_i32 = arith.constant 0 : i32
    %c0_i32_0 = arith.constant 0 : i32
    %c0_i32_1 = arith.constant 0 : i32
    return %arg0, %c0_i32, %c0_i32_0 : i32, i32, i32
  }
  func.func @transform_3(%arg0: i32) -> (i32, i32) {
    %c0_i32 = arith.constant 0 : i32
    %c0_i32_0 = arith.constant 0 : i32
    %c0_i32_1 = arith.constant 0 : i32
    return %c0_i32, %c0_i32_0 : i32, i32
  }
  func.func @transform_4(%arg0: i32) -> (i32, i32, i32) {
    %c0_i32 = arith.constant 0 : i32
    %c0_i32_0 = arith.constant 0 : i32
    %c0_i32_1 = arith.constant 0 : i32
    %c0_i32_2 = arith.constant 0 : i32
    return %c0_i32, %c0_i32_0, %c0_i32_1 : i32, i32, i32
  }
  func.func @transform_5(%arg0: i32) -> (i32, i32) {
    %c0_i32 = arith.constant 0 : i32
    %c0_i32_0 = arith.constant 0 : i32
    %c0_i32_1 = arith.constant 0 : i32
    return %c0_i32, %c0_i32_0 : i32, i32
  }
  func.func @transform_6(%arg0: i32) -> (i32, i32, i32) {
    %c0_i32 = arith.constant 0 : i32
    %c0_i32_0 = arith.constant 0 : i32
    %c0_i32_1 = arith.constant 0 : i32
    %c0_i32_2 = arith.constant 0 : i32
    return %c0_i32, %c0_i32_0, %c0_i32_1 : i32, i32, i32
  }
  func.func @transform_7(%arg0: i32) -> (i32, i32, i32) {
    %c0_i32 = arith.constant 0 : i32
    %c0_i32_0 = arith.constant 0 : i32
    %c0_i32_1 = arith.constant 0 : i32
    %c0_i32_2 = arith.constant 0 : i32
    return %c0_i32, %c0_i32_0, %c0_i32_1 : i32, i32, i32
  }
  func.func @transform_8(%arg0: i32) -> (i32, i32, i32) {
    %c0_i32 = arith.constant 0 : i32
    %c0_i32_0 = arith.constant 0 : i32
    %c0_i32_1 = arith.constant 0 : i32
    return %arg0, %c0_i32, %c0_i32_0 : i32, i32, i32
  }
}

</mosaic_0001>

<llo_original>
// kernel: attention_edge_layer.1
$region0: #{attention_edge_layer.1}
  #allocation0 [shape = 'u32[]', space=smem, size = 0x4, offset = 0x4, fixed_abs, tag = 'smem constant byte address 0x4 - core index']
  #allocation1 [shape = 'u32[72,128]{1,0:T(1,128)}', space=vmem, size = 0x9000, scoped, tag = 'internal scratch']
  %s0 = inlined_call_operand.vmem [shape: f32[2,8,16], index: 0, kind: input, shape index: {}]
  %s1 = inlined_call_operand.vmem [shape: f32[16,8], index: 1, kind: input, shape index: {}]
  %s2 = inlined_call_operand.vmem [shape: f32[2,8,6], index: 2, kind: input, shape index: {}]
  %s3 = inlined_call_operand.vmem [shape: f32[8,2], index: 3, kind: input, shape index: {}]
  %s4 = inlined_call_operand.hbm [shape: f32[2,8,6], index: 4, kind: input, shape index: {}]
  %s5 = inlined_call_operand.vmem [shape: f32[2,6], index: 5, kind: input, shape index: {}]
  %s6 = inlined_call_operand.vmem [shape: f32[2,8,8], index: 6, kind: input, shape index: {}]
  %s7 = inlined_call_operand.vmem [shape: f32[2,6,6], index: 7, kind: input, shape index: {}]
  %s8 = inlined_call_operand.vmem [shape: f32[2,6,8], index: 8, kind: output, shape index: {}]
  %s9 = sld [smem:[#allocation0]]
  $region69: #{attention_edge_layer.1} parent=0
    _
  %s11 = ssub.s32 1, %s9
  %s12 = scalar_select 0, %s11, %s9
  $region1: #{attention_edge_layer.1} parent=0
    #allocation2 [shape = 'u8[8192]{0}', space=vmem, size = 0x2000, scoped, tag = 'input window, operand 4, single buffered']
    #allocation3 [shape = 's32[2]{0}', space=sflag, size = 0x8, scoped, tag = 'scoped memory for attention_edge_layer.1']
    %13 = vsyncpa [#allocation3], 0
    loop: start=0, step=1, limit=4
    $region2: #{attention_edge_layer.1} parent=1 // loop_pre_header
      _
    $region3: #{attention_edge_layer.1} parent=1 // loop_header
      %s15 = sphi 0, %s19
      %p16 = scmp.ge.s32.totalorder %s15, 4
      %s25 = sphi 0, %s27
      %s28 = sphi 0, %s25
      %s29 = sphi 0, %s28
      %s45 = sphi 0, %s29
      %s49 = sphi 0, %s49
      %s51 = sphi 0, %s49
      %s52 = sphi 0, %s51
      %s66 = sphi 0, %s52
      %s72 = sphi 0, %s74
      %s75 = sphi 0, %s72
      %s76 = sphi 0, %s75
      %s92 = sphi 0, %s76
      %s96 = sphi 0, %s96
      %s98 = sphi 0, %s96
      %s99 = sphi 0, %s98
      %s113 = sphi 0, %s99
      %s117 = sphi 0, %s117
      %s119 = sphi 0, %s117
      %s120 = sphi 0, %s119
      %s134 = sphi 0, %s120
      %s138 = sphi 0, %s138
      %s140 = sphi 0, %s138
      %s141 = sphi 0, %s140
      %s155 = sphi 0, %s141
      %s159 = sphi 0, %s159
      %s161 = sphi 0, %s159
      %s162 = sphi 0, %s161
      %s176 = sphi 0, %s162
      %s180 = sphi 0, %s180
      %s182 = sphi 0, %s180
      %s183 = sphi 0, %s182
      %s197 = sphi 0, %s183
      %s203 = sphi 0, %s205
      %s206 = sphi 0, %s203
      %s207 = sphi 0, %s206
      %s223 = sphi 0, %s207
    $region4: #{attention_edge_layer.1} parent=1 // loop_header_branch
      %18 = sbr.rel (%p16) target = $region8
    $region5: #{attention_edge_layer.1} parent=1 // loop_body
      %s20 = ssub.s32 %s15, 1
      %s21 = ssub.s32 %s15, 2
      %s22 = sadd.s32 %s15, 1
      %s23 = ssub.s32 %s15, %s22
      %p24 = scmp.eq.s32.totalorder %s23, 0
      %s26 = sadd.s32 %s25, 1
      %s27 = scalar_select %p24, %s25, %s26
      %p30 = pneg %p24
      %p31 = scmp.eq.s32.totalorder %s15, 1
      %p32 = por %p30, %p31
      %p33 = scmp.ne.s32.totalorder %s25, %s28
      %p34 = scmp.eq.s32.totalorder %s15, 0
      %p35 = por %p33, %p34
      %p36 = scmp.ne.s32.totalorder %s25, %s28
      %p37 = scmp.eq.s32.totalorder %s20, 1
      %p38 = por %p36, %p37
      %p39 = scmp.ne.s32.totalorder %s28, %s29
      %p40 = scmp.eq.s32.totalorder %s20, 0
      %p41 = por %p39, %p40
      %p42 = scmp.ne.s32.totalorder %s28, %s29
      %p43 = scmp.eq.s32.totalorder %s21, 1
      %p44 = por %p42, %p43
      %p46 = scmp.ne.s32.totalorder %s29, %s45
      %p47 = scmp.eq.s32.totalorder %s21, 0
      %p48 = por %p46, %p47
      %s50 = sadd.s32 %s49, 1
      %p53 = scmp.eq.s32.totalorder %s15, 1
      %p54 = scmp.ne.s32.totalorder %s49, %s51
      %p55 = scmp.eq.s32.totalorder %s15, 0
      %p56 = por %p54, %p55
      %p57 = scmp.ne.s32.totalorder %s49, %s51
      %p58 = scmp.eq.s32.totalorder %s20, 1
      %p59 = por %p57, %p58
      %p60 = scmp.ne.s32.totalorder %s51, %s52
      %p61 = scmp.eq.s32.totalorder %s20, 0
      %p62 = por %p60, %p61
      %p63 = scmp.ne.s32.totalorder %s51, %s52
      %p64 = scmp.eq.s32.totalorder %s21, 1
      %p65 = por %p63, %p64
      %p67 = scmp.ne.s32.totalorder %s52, %s66
      %p68 = scmp.eq.s32.totalorder %s21, 0
      %p69 = por %p67, %p68
      %s70 = ssub.s32 %s15, %s22
      %p71 = scmp.eq.s32.totalorder %s70, 0
      %s73 = sadd.s32 %s72, 1
      %s74 = scalar_select %p71, %s72, %s73
      %p77 = pneg %p71
      %p78 = scmp.eq.s32.totalorder %s15, 1
      %p79 = por %p77, %p78
      %p80 = scmp.ne.s32.totalorder %s72, %s75
      %p81 = scmp.eq.s32.totalorder %s15, 0
      %p82 = por %p80, %p81
      %p83 = scmp.ne.s32.totalorder %s72, %s75
      %p84 = scmp.eq.s32.totalorder %s20, 1
      %p85 = por %p83, %p84
      %p86 = scmp.ne.s32.totalorder %s75, %s76
      %p87 = scmp.eq.s32.totalorder %s20, 0
      %p88 = por %p86, %p87
      %p89 = scmp.ne.s32.totalorder %s75, %s76
      %p90 = scmp.eq.s32.totalorder %s21, 1
      %p91 = por %p89, %p90
      %p93 = scmp.ne.s32.totalorder %s76, %s92
      %p94 = scmp.eq.s32.totalorder %s21, 0
      %p95 = por %p93, %p94
      %s97 = sadd.s32 %s96, 1
      %p100 = scmp.eq.s32.totalorder %s15, 1
      %p101 = scmp.ne.s32.totalorder %s96, %s98
      %p102 = scmp.eq.s32.totalorder %s15, 0
      %p103 = por %p101, %p102
      %p104 = scmp.ne.s32.totalorder %s96, %s98
      %p105 = scmp.eq.s32.totalorder %s20, 1
      %p106 = por %p104, %p105
      %p107 = scmp.ne.s32.totalorder %s98, %s99
      %p108 = scmp.eq.s32.totalorder %s20, 0
      %p109 = por %p107, %p108
      %p110 = scmp.ne.s32.totalorder %s98, %s99
      %p111 = scmp.eq.s32.totalorder %s21, 1
      %p112 = por %p110, %p111
      %p114 = scmp.ne.s32.totalorder %s99, %s113
      %p115 = scmp.eq.s32.totalorder %s21, 0
      %p116 = por %p114, %p115
      %s118 = sadd.s32 %s117, 1
      %p121 = scmp.eq.s32.totalorder %s15, 1
      %p122 = scmp.ne.s32.totalorder %s117, %s119
      %p123 = scmp.eq.s32.totalorder %s15, 0
      %p124 = por %p122, %p123
      %p125 = scmp.ne.s32.totalorder %s117, %s119
      %p126 = scmp.eq.s32.totalorder %s20, 1
      %p127 = por %p125, %p126
      %p128 = scmp.ne.s32.totalorder %s119, %s120
      %p129 = scmp.eq.s32.totalorder %s20, 0
      %p130 = por %p128, %p129
      %p131 = scmp.ne.s32.totalorder %s119, %s120
      %p132 = scmp.eq.s32.totalorder %s21, 1
      %p133 = por %p131, %p132
      %p135 = scmp.ne.s32.totalorder %s120, %s134
      %p136 = scmp.eq.s32.totalorder %s21, 0
      %p137 = por %p135, %p136
      %s139 = sadd.s32 %s138, 1
      %p142 = scmp.eq.s32.totalorder %s15, 1
      %p143 = scmp.ne.s32.totalorder %s138, %s140
      %p144 = scmp.eq.s32.totalorder %s15, 0
      %p145 = por %p143, %p144
      %p146 = scmp.ne.s32.totalorder %s138, %s140
      %p147 = scmp.eq.s32.totalorder %s20, 1
      %p148 = por %p146, %p147
      %p149 = scmp.ne.s32.totalorder %s140, %s141
      %p150 = scmp.eq.s32.totalorder %s20, 0
      %p151 = por %p149, %p150
      %p152 = scmp.ne.s32.totalorder %s140, %s141
      %p153 = scmp.eq.s32.totalorder %s21, 1
      %p154 = por %p152, %p153
      %p156 = scmp.ne.s32.totalorder %s141, %s155
      %p157 = scmp.eq.s32.totalorder %s21, 0
      %p158 = por %p156, %p157
      %s160 = sadd.s32 %s159, 1
      %p163 = scmp.eq.s32.totalorder %s15, 1
      %p164 = scmp.ne.s32.totalorder %s159, %s161
      %p165 = scmp.eq.s32.totalorder %s15, 0
      %p166 = por %p164, %p165
      %p167 = scmp.ne.s32.totalorder %s159, %s161
      %p168 = scmp.eq.s32.totalorder %s20, 1
      %p169 = por %p167, %p168
      %p170 = scmp.ne.s32.totalorder %s161, %s162
      %p171 = scmp.eq.s32.totalorder %s20, 0
      %p172 = por %p170, %p171
      %p173 = scmp.ne.s32.totalorder %s161, %s162
      %p174 = scmp.eq.s32.totalorder %s21, 1
      %p175 = por %p173, %p174
      %p177 = scmp.ne.s32.totalorder %s162, %s176
      %p178 = scmp.eq.s32.totalorder %s21, 0
      %p179 = por %p177, %p178
      %s181 = sadd.s32 %s180, 1
      %p184 = scmp.eq.s32.totalorder %s15, 1
      %p185 = scmp.ne.s32.totalorder %s180, %s182
      %p186 = scmp.eq.s32.totalorder %s15, 0
      %p187 = por %p185, %p186
      %p188 = scmp.ne.s32.totalorder %s180, %s182
      %p189 = scmp.eq.s32.totalorder %s20, 1
      %p190 = por %p188, %p189
      %p191 = scmp.ne.s32.totalorder %s182, %s183
      %p192 = scmp.eq.s32.totalorder %s20, 0
      %p193 = por %p191, %p192
      %p194 = scmp.ne.s32.totalorder %s182, %s183
      %p195 = scmp.eq.s32.totalorder %s21, 1
      %p196 = por %p194, %p195
      %p198 = scmp.ne.s32.totalorder %s183, %s197
      %p199 = scmp.eq.s32.totalorder %s21, 0
      %p200 = por %p198, %p199
      %s201 = ssub.s32 %s15, %s22
      %p202 = scmp.eq.s32.totalorder %s201, 0
      %s204 = sadd.s32 %s203, 1
      %s205 = scalar_select %p202, %s203, %s204
      %p208 = pneg %p202
      %p209 = scmp.eq.s32.totalorder %s15, 1
      %p210 = por %p208, %p209
      %p211 = scmp.ne.s32.totalorder %s203, %s206
      %p212 = scmp.eq.s32.totalorder %s15, 0
      %p213 = por %p211, %p212
      %p214 = scmp.ne.s32.totalorder %s203, %s206
      %p215 = scmp.eq.s32.totalorder %s20, 1
      %p216 = por %p214, %p215
      %p217 = scmp.ne.s32.totalorder %s206, %s207
      %p218 = scmp.eq.s32.totalorder %s20, 0
      %p219 = por %p217, %p218
      %p220 = scmp.ne.s32.totalorder %s206, %s207
      %p221 = scmp.eq.s32.totalorder %s21, 1
      %p222 = por %p220, %p221
      %p224 = scmp.ne.s32.totalorder %s207, %s223
      %p225 = scmp.eq.s32.totalorder %s21, 0
      %p226 = por %p224, %p225
      %p227 = scmp.le.s32.totalorder 1, %s15
      %p228 = scmp.lt.s32.totalorder %s15, 3
      %p229 = pnand %p227, %p228
      %p230 = pneg %p229
      // Predicated region
      $region9: #{attention_edge_layer.1} parent=5 // pred_check
        _
      $region10: #{attention_edge_layer.1} parent=5 // pred_check_branch
        %232 = sbr.rel (%p229) target = $region12
      $region11: #{attention_edge_layer.1} parent=5 // pred_region
        %s233 = ssub.s32 %s15, 1
        // Predicated region
        $region13: #{attention_edge_layer.1} parent=11 // pred_check
          %p234 = pneg %p62
        $region14: #{attention_edge_layer.1} parent=11 // pred_check_branch
          %236 = sbr.rel (%p234) target = $region16
        $region15: #{attention_edge_layer.1} parent=11 // pred_region
          _
        $region16: #{attention_edge_layer.1} parent=11 // pred_fallthru
          _
        // Predicated region
        $region17: #{attention_edge_layer.1} parent=11 // pred_check
          %p237 = pneg %p109
        $region18: #{attention_edge_layer.1} parent=11 // pred_check_branch
          %239 = sbr.rel (%p237) target = $region20
        $region19: #{attention_edge_layer.1} parent=11 // pred_region
          _
        $region20: #{attention_edge_layer.1} parent=11 // pred_fallthru
          _
        // Predicated region
        $region21: #{attention_edge_layer.1} parent=11 // pred_check
          %p240 = pneg %p130
        $region22: #{attention_edge_layer.1} parent=11 // pred_check_branch
          %242 = sbr.rel (%p240) target = $region24
        $region23: #{attention_edge_layer.1} parent=11 // pred_region
          %244 = vsyncadd [#allocation3], 0
          %s245 = sshll.u32 %s4, 4
          %s246 = int_to_ptr.hbm [resolvable:$true] %s245
          %s247 = sshll.u32 [#allocation2], 4
          %s248 = int_to_ptr.vmem [resolvable:$true] %s247
          %253 = dma.hbm_to_vmem [thread:$0]  %s246, 256, %s248, [#allocation3], 128, 128, 8
        $region24: #{attention_edge_layer.1} parent=11 // pred_fallthru
          _
        // Predicated region
        $region25: #{attention_edge_layer.1} parent=11 // pred_check
          %p254 = pneg %p151
        $region26: #{attention_edge_layer.1} parent=11 // pred_check_branch
          %256 = sbr.rel (%p254) target = $region28
        $region27: #{attention_edge_layer.1} parent=11 // pred_region
          _
        $region28: #{attention_edge_layer.1} parent=11 // pred_fallthru
          _
        // Predicated region
        $region29: #{attention_edge_layer.1} parent=11 // pred_check
          %p257 = pneg %p172
        $region30: #{attention_edge_layer.1} parent=11 // pred_check_branch
          %259 = sbr.rel (%p257) target = $region32
        $region31: #{attention_edge_layer.1} parent=11 // pred_region
          _
        $region32: #{attention_edge_layer.1} parent=11 // pred_fallthru
          _
        // Predicated region
        $region33: #{attention_edge_layer.1} parent=11 // pred_check
          %p260 = pneg %p193
        $region34: #{attention_edge_layer.1} parent=11 // pred_check_branch
          %262 = sbr.rel (%p260) target = $region36
        $region35: #{attention_edge_layer.1} parent=11 // pred_region
          _
        $region36: #{attention_edge_layer.1} parent=11 // pred_fallthru
          _
      $region12: #{attention_edge_layer.1} parent=5 // pred_fallthru
        _
      %p263 = scmp.lt.s32.totalorder %s15, 2
      // Predicated region
      $region37: #{attention_edge_layer.1} parent=5 // pred_check
        %p264 = pneg %p263
      $region38: #{attention_edge_layer.1} parent=5 // pred_check_branch
        %266 = sbr.rel (%p264) target = $region40
      $region39: #{attention_edge_layer.1} parent=5 // pred_region
        // Predicated region
        $region41: #{attention_edge_layer.1} parent=39 // pred_check
          %p267 = pneg %p35
        $region42: #{attention_edge_layer.1} parent=39 // pred_check_branch
          %269 = sbr.rel (%p267) target = $region44
        $region43: #{attention_edge_layer.1} parent=39 // pred_region
          %p270 = scmp.lt.s32.totalorder %s15, 1
          %s271 = scalar_select %p270, %s15, 1
          %s272 = smul.addr %s271, 8
          %s273 = scalar_lea.vmem %s0, %s272
        $region44: #{attention_edge_layer.1} parent=39 // pred_fallthru
          _
        // Predicated region
        $region45: #{attention_edge_layer.1} parent=39 // pred_check
          %p274 = pneg %p82
        $region46: #{attention_edge_layer.1} parent=39 // pred_check_branch
          %276 = sbr.rel (%p274) target = $region48
        $region47: #{attention_edge_layer.1} parent=39 // pred_region
          %p277 = scmp.lt.s32.totalorder %s15, 1
          %s278 = scalar_select %p277, %s15, 1
          %s279 = smul.addr %s278, 8
          %s280 = scalar_lea.vmem %s2, %s279
        $region48: #{attention_edge_layer.1} parent=39 // pred_fallthru
          _
      $region40: #{attention_edge_layer.1} parent=5 // pred_fallthru
        _
      %p281 = scmp.le.s32.totalorder 1, %s15
      %p282 = scmp.lt.s32.totalorder %s15, 3
      %p283 = pnand %p281, %p282
      %p284 = pneg %p283
      // Predicated region
      $region49: #{attention_edge_layer.1} parent=5 // pred_check
        _
      $region50: #{attention_edge_layer.1} parent=5 // pred_check_branch
        %286 = sbr.rel (%p283) target = $region52
      $region51: #{attention_edge_layer.1} parent=5 // pred_region
        %s287 = ssub.s32 %s15, 1
        // Predicated region
        $region53: #{attention_edge_layer.1} parent=51 // pred_check
          %p288 = pneg %p130
        $region54: #{attention_edge_layer.1} parent=51 // pred_check_branch
          %290 = sbr.rel (%p288) target = $region56
        $region55: #{attention_edge_layer.1} parent=51 // pred_region
          %292 = dma.done [#allocation3], 256
        $region56: #{attention_edge_layer.1} parent=51 // pred_fallthru
          _
        %p293 = scmp.lt.s32.totalorder %s20, 1
        %s294 = scalar_select %p293, %s20, 1
        %s295 = smul.addr %s294, 8
        %s296 = scalar_lea.vmem %s0, %s295
        %p297 = pneg %p41
        %p298 = pneg %p38
        %p299 = pneg %p62
        %p300 = pneg %p59
        %p301 = scmp.lt.s32.totalorder %s20, 1
        %s302 = scalar_select %p301, %s20, 1
        %s303 = smul.addr %s302, 8
        %s304 = scalar_lea.vmem %s2, %s303
        %p305 = pneg %p88
        %p306 = pneg %p85
        %p307 = pneg %p109
        %p308 = pneg %p106
        %p309 = pneg %p130
        %p310 = pneg %p127
        %p311 = pneg %p151
        %p312 = pneg %p148
        %p313 = pneg %p172
        %p314 = pneg %p169
        %p315 = pneg %p193
        %p316 = pneg %p190
        %p317 = pneg %p219
        %p318 = pneg %p216
        %p319 = scmp.lt.s32.totalorder %s20, 1
        %s320 = scalar_select %p319, %s20, 1
        %s321 = smul.addr %s320, 8
        %s322 = scalar_lea.vmem %s8, %s321
        %p323 = scmp.lt.s32.totalorder %s20, 1
        %s324 = scalar_select %p323, %s20, 1
        %s325 = smul.addr %s324, 8
        %s326 = scalar_lea.vmem %s0, %s325
        %p327 = scmp.lt.s32.totalorder %s20, 1
        %s328 = scalar_select %p327, %s20, 1
        %s329 = smul.addr %s328, 8
        %s330 = scalar_lea.vmem %s2, %s329
        %p331 = scmp.lt.s32.totalorder %s20, 1
        %s332 = scalar_select %p331, %s20, 1
        %s333 = smul.addr %s332, 8
        %s334 = scalar_lea.vmem %s8, %s333
        %v335 = vld [vmem:[%s326] sm:$0xff]
        %v336 = vld [vmem:[%s1] sm:$0xff]
        %v337 = vld [vmem:[%s1 + $0x8] sm:$0xff]
        %v338 = vld [vmem:[%s330] sm:$0xff]
        %v339 = vld [vmem:[%s3] sm:$0xff]
        %vm340 = vcmask 130048
        %v342 = vsel %vm340, %v335, 0
        %344 = vmatpush.msra.mxu0 0.0
        %345 = vmatpush.msra.mxu0 0.0
        %346 = vmatpush.msra.mxu0 0.0
        %347 = vmatpush.msra.mxu0 0.0
        %348 = vmatpush.msra.mxu0 0.0
        %349 = vmatpush.msra.mxu0 0.0
        %350 = vmatpush.msra.mxu0 0.0
        %351 = vmatpush.msra.mxu0 0.0
        %352 = vmatpush.msra.mxu0 0.0
        %353 = vmatpush.msra.mxu0 0.0
        %354 = vmatpush.msra.mxu0 0.0
        %355 = vmatpush.msra.mxu0 0.0
        %356 = vmatpush.msra.mxu0 0.0
        %357 = vmatpush.msra.mxu0 0.0
        %358 = vmatpush.msra.mxu0 %v337
        %359 = vmatpush.msra.mxu0 %v336
        %360 = vmatmul.f32.gmra.mxu0 %v342
        %v361 = vpop.f32.mrf.mxu0
        %v362 = vadd.f32 0.0, %v361
        %363 = vdwg.mxu0
        %vm364 = vcmask 64512
        %v366 = vsel %vm364, %v362, 0
        %368 = vmatpush.msra.mxu0 0.0
        %369 = vmatpush.msra.mxu0 0.0
        %370 = vmatpush.msra.mxu0 0.0
        %371 = vmatpush.msra.mxu0 0.0
        %372 = vmatpush.msra.mxu0 0.0
        %373 = vmatpush.msra.mxu0 0.0
        %374 = vmatpush.msra.mxu0 0.0
        %375 = vmatpush.msra.mxu0 0.0
        %376 = vmatpush.msra.mxu0 0.0
        %377 = vmatpush.msra.mxu0 0.0
        %378 = vmatpush.msra.mxu0 0.0
        %379 = vmatpush.msra.mxu0 0.0
        %380 = vmatpush.msra.mxu0 0.0
        %381 = vmatpush.msra.mxu0 0.0
        %382 = vmatpush.msra.mxu0 0.0
        %383 = vmatpush.msra.mxu0 %v339
        %384 = vmatmul.f32.gmra.mxu0 %v366
        %v385 = vpop.f32.mrf.mxu0
        %v386 = vadd.f32 0.0, %v385
        %387 = vdwg.mxu0
        %388 = vxpose.xlu0.b32.start [1/16] %v386, 128
        %389 = vxpose.xlu0.b32.cont [2/16] 0.0, 128
        %390 = vxpose.xlu0.b32.cont [3/16] 0.0, 128
        %391 = vxpose.xlu0.b32.cont [4/16] 0.0, 128
        %392 = vxpose.xlu0.b32.cont [5/16] 0.0, 128
        %393 = vxpose.xlu0.b32.cont [6/16] 0.0, 128
        %394 = vxpose.xlu0.b32.cont [7/16] 0.0, 128
        %395 = vxpose.xlu0.b32.cont [8/16] 0.0, 128
        %396 = vxpose.xlu0.b32.cont [9/16] 0.0, 128
        %397 = vxpose.xlu0.b32.cont [10/16] 0.0, 128
        %398 = vxpose.xlu0.b32.cont [11/16] 0.0, 128
        %399 = vxpose.xlu0.b32.cont [12/16] 0.0, 128
        %400 = vxpose.xlu0.b32.cont [13/16] 0.0, 128
        %401 = vxpose.xlu0.b32.cont [14/16] 0.0, 128
        %402 = vxpose.xlu0.b32.cont [15/16] 0.0, 128
        %403 = vxpose.xlu0.b32.end [16/16] 0.0, 128
        %v404 = vpop.trf.xlu0
        %v405 = vpop.trf.xlu0
        %v406 = vpop.trf.xlu0
        %v407 = vpop.trf.xlu0
        %v408 = vpop.trf.xlu0
        %v409 = vpop.trf.xlu0
        %v410 = vpop.trf.xlu0
        %v411 = vpop.trf.xlu0
        %v412 = vpop.trf.xlu0
        %v413 = vpop.trf.xlu0
        %v414 = vpop.trf.xlu0
        %v415 = vpop.trf.xlu0
        %v416 = vpop.trf.xlu0
        %v417 = vpop.trf.xlu0
        %v418 = vpop.trf.xlu0
        %v419 = vpop.trf.xlu0
        %v421 = vsel %vm364, %v404, 0
        %423 = vmatpush.msra.mxu0 0.0
        %424 = vmatpush.msra.mxu0 0.0
        %425 = vmatpush.msra.mxu0 0.0
        %426 = vmatpush.msra.mxu0 0.0
        %427 = vmatpush.msra.mxu0 0.0
        %428 = vmatpush.msra.mxu0 0.0
        %429 = vmatpush.msra.mxu0 0.0
        %430 = vmatpush.msra.mxu0 0.0
        %431 = vmatpush.msra.mxu0 0.0
        %432 = vmatpush.msra.mxu0 0.0
        %433 = vmatpush.msra.mxu0 0.0
        %434 = vmatpush.msra.mxu0 0.0
        %435 = vmatpush.msra.mxu0 0.0
        %436 = vmatpush.msra.mxu0 0.0
        %437 = vmatpush.msra.mxu0 0.0
        %438 = vmatpush.msra.mxu0 %v338
        %439 = vmatmul.f32.gmra.mxu0 %v421
        %v440 = vpop.f32.mrf.mxu0
        %v441 = vadd.f32 0.0, %v440
        %442 = vdwg.mxu0
        %vm443 = vcmask 48128
        %v444 = vsel %vm443, %v338, 0.0
        %v445 = vrot.slane %v444, 4
        %v446 = vadd.f32 %v444, %v445
        %v447 = vrot.slane %v446, 2
        %v448 = vadd.f32 %v446, %v447
        %v449 = vrot.slane %v448, 1
        %v450 = vadd.f32 %v448, %v449
        %vm451 = vcmp.eq.f32.partialorder %v450, 0.0
        %v452 = vsel %vm451, 1.0, %v450
        %v453 = vrcp.pop %v452
        %v454 = vmul.f32 %v441, %v453
        %v455 = vld [vmem:[%s6] sm:$0xff]
        %v457 = vsel %vm364, %v455, 0
        %459 = vmatpush.msra.mxu0 0.0
        %460 = vmatpush.msra.mxu0 0.0
        %461 = vmatpush.msra.mxu0 0.0
        %462 = vmatpush.msra.mxu0 0.0
        %463 = vmatpush.msra.mxu0 0.0
        %464 = vmatpush.msra.mxu0 0.0
        %465 = vmatpush.msra.mxu0 0.0
        %466 = vmatpush.msra.mxu0 0.0
        %467 = vmatpush.msra.mxu0 0.0
        %468 = vmatpush.msra.mxu0 0.0
        %469 = vmatpush.msra.mxu0 0.0
        %470 = vmatpush.msra.mxu0 0.0
        %471 = vmatpush.msra.mxu0 0.0
        %472 = vmatpush.msra.mxu0 0.0
        %473 = vmatpush.msra.mxu0 0.0
        %474 = vmatpush.msra.mxu0 %v386
        %475 = vmatmul.f32.gmra.mxu0 %v457
        %v476 = vpop.f32.mrf.mxu0
        %v477 = vadd.f32 0.0, %v476
        %478 = vdwg.mxu0
        %s479 = scalar_lea.vmem %s6, 8
        %v480 = vld [vmem:[%s479] sm:$0xff]
        %v482 = vsel %vm364, %v480, 0
        %484 = vmatpush.msra.mxu0 0.0
        %485 = vmatpush.msra.mxu0 0.0
        %486 = vmatpush.msra.mxu0 0.0
        %487 = vmatpush.msra.mxu0 0.0
        %488 = vmatpush.msra.mxu0 0.0
        %489 = vmatpush.msra.mxu0 0.0
        %490 = vmatpush.msra.mxu0 0.0
        %491 = vmatpush.msra.mxu0 0.0
        %492 = vmatpush.msra.mxu0 0.0
        %493 = vmatpush.msra.mxu0 0.0
        %494 = vmatpush.msra.mxu0 0.0
        %495 = vmatpush.msra.mxu0 0.0
        %496 = vmatpush.msra.mxu0 0.0
        %497 = vmatpush.msra.mxu0 0.0
        %498 = vmatpush.msra.mxu0 0.0
        %499 = vmatpush.msra.mxu0 %v386
        %500 = vmatmul.f32.gmra.mxu0 %v482
        %v501 = vpop.f32.mrf.mxu0
        %v502 = vadd.f32 0.0, %v501
        %503 = vdwg.mxu0
        %v504 = vld [vmem:[%s7] sm:$0x3f]
        %v506 = vsel %vm443, %v454, 0
        %vm508 = vcmask 1045504
        %v510 = vsel %vm508, %v504, 0
        %512 = vmatpush.msra.mxu0 0.0
        %513 = vmatpush.msra.mxu0 0.0
        %514 = vmatpush.msra.mxu0 0.0
        %515 = vmatpush.msra.mxu0 0.0
        %516 = vmatpush.msra.mxu0 0.0
        %517 = vmatpush.msra.mxu0 0.0
        %518 = vmatpush.msra.mxu0 0.0
        %519 = vmatpush.msra.mxu0 0.0
        %520 = vmatpush.msra.mxu0 0.0
        %521 = vmatpush.msra.mxu0 0.0
        %522 = vmatpush.msra.mxu0 0.0
        %523 = vmatpush.msra.mxu0 0.0
        %524 = vmatpush.msra.mxu0 0.0
        %525 = vmatpush.msra.mxu0 0.0
        %526 = vmatpush.msra.mxu0 0.0
        %527 = vmatpush.msra.mxu0 %v510
        %528 = vmatmul.f32.gmra.mxu0 %v506
        %v529 = vpop.f32.mrf.mxu0
        %v530 = vadd.f32 0.0, %v529
        %531 = vdwg.mxu0
        %s532 = scalar_lea.vmem %s7, 8
        %v533 = vld [vmem:[%s532] sm:$0x3f]
        %v534 = vrot.slane %v454, 1
        %v535 = vsel %vm443, %v534, 0
        %v538 = vsel %vm508, %v533, 0
        %540 = vmatpush.msra.mxu0 0.0
        %541 = vmatpush.msra.mxu0 0.0
        %542 = vmatpush.msra.mxu0 0.0
        %543 = vmatpush.msra.mxu0 0.0
        %544 = vmatpush.msra.mxu0 0.0
        %545 = vmatpush.msra.mxu0 0.0
        %546 = vmatpush.msra.mxu0 0.0
        %547 = vmatpush.msra.mxu0 0.0
        %548 = vmatpush.msra.mxu0 0.0
        %549 = vmatpush.msra.mxu0 0.0
        %550 = vmatpush.msra.mxu0 0.0
        %551 = vmatpush.msra.mxu0 0.0
        %552 = vmatpush.msra.mxu0 0.0
        %553 = vmatpush.msra.mxu0 0.0
        %554 = vmatpush.msra.mxu0 0.0
        %555 = vmatpush.msra.mxu0 %v538
        %556 = vmatmul.f32.gmra.mxu0 %v535
        %v557 = vpop.f32.mrf.mxu0
        %v558 = vadd.f32 0.0, %v557
        %559 = vdwg.mxu0
        %v560 = vld [vmem:[%s5] sm:$0x1]
        %v561 = vld [vmem:[%s5 + $0x1] sm:$0x1]
        %v562 = vld [vmem:[#allocation2] sm:$0xff]
        %s563 = scalar_lea.vmem [#allocation2], 8
        %v564 = vld [vmem:[%s563] sm:$0xff]
        %v565 = vsub.f32 1.0, %v560
        %567 = vset.pattern.permute.xlu0 0
        %568 = vperm.xlu0 %567, %v477
        %v569 = vpop.permute.xlu0 %568
        %v571 = vperm.slane %v565, 0
        %v572 = vmul.f32 %v569, %v571
        %574 = vset.pattern.permute.xlu0 0
        %575 = vperm.xlu0 %574, %v502
        %v576 = vpop.permute.xlu0 %575
        %v578 = vperm.slane %v560, 0
        %v579 = vmul.f32 %v576, %v578
        %v580 = vadd.f32 %v572, %v579
        %v581 = vsub.f32 1.0, %v561
        %582 = vset.pattern.permute.xlu0 1
        %583 = vperm.xlu0 %582, %v477
        %v584 = vpop.permute.xlu0 %583
        %v586 = vperm.slane %v581, 0
        %v587 = vmul.f32 %v584, %v586
        %588 = vset.pattern.permute.xlu0 1
        %589 = vperm.xlu0 %588, %v502
        %v590 = vpop.permute.xlu0 %589
        %v592 = vperm.slane %v561, 0
        %v593 = vmul.f32 %v590, %v592
        %v594 = vadd.f32 %v587, %v593
        %v595 = vmul.f32 %v562, %v580
        %v596 = vsub.f32 1.0, %v562
        %v597 = vperm.slane %v530, 0
        %v598 = vmul.f32 %v596, %v597
        %v599 = vadd.f32 %v595, %v598
        %v600 = vmul.f32 %v564, %v594
        %v601 = vadd.f32 %v599, %v600
        %v602 = vsub.f32 1.0, %v564
        %v603 = vperm.slane %v558, 0
        %v604 = vmul.f32 %v602, %v603
        %v605 = vadd.f32 %v601, %v604
        %vm606 = vcmp.gt.f32.partialorder %v605, 0.0
        %v607 = vmul.f32 %v605, 0.01
        %v608 = vsel %vm606, %v605, %v607
        %vm609 = vcmp.gt.f32.partialorder %v338, 0.0
        %v610 = vsel %vm609, %v608, -1e+12
        %v611 = vsel %vm443, %v610, -inf
        %612 = vmax.xlane.f32.xlu0 %v611
        %v613 = vpop.xlane.xlu0 %612
        %v614 = vsub.f32 %v610, %v613
        %v615 = vmul.f32 %v614, 1.442695
        %v616 = vpow.pop %v615
        %v617 = vsel %vm443, %v616, 0.0
        %618 = vadd.xlane.f32.xlu0 %v617
        %v619 = vpop.xlane.xlu0 %618
        %v620 = vrcp.pop %v619
        %v621 = vmul.f32 %v616, %v620
        %622 = vxpose.xlu0.b32.start [1/16] %v621, 128
        %623 = vxpose.xlu0.b32.cont [2/16] 0.0, 128
        %624 = vxpose.xlu0.b32.cont [3/16] 0.0, 128
        %625 = vxpose.xlu0.b32.cont [4/16] 0.0, 128
        %626 = vxpose.xlu0.b32.cont [5/16] 0.0, 128
        %627 = vxpose.xlu0.b32.cont [6/16] 0.0, 128
        %628 = vxpose.xlu0.b32.cont [7/16] 0.0, 128
        %629 = vxpose.xlu0.b32.cont [8/16] 0.0, 128
        %630 = vxpose.xlu0.b32.cont [9/16] 0.0, 128
        %631 = vxpose.xlu0.b32.cont [10/16] 0.0, 128
        %632 = vxpose.xlu0.b32.cont [11/16] 0.0, 128
        %633 = vxpose.xlu0.b32.cont [12/16] 0.0, 128
        %634 = vxpose.xlu0.b32.cont [13/16] 0.0, 128
        %635 = vxpose.xlu0.b32.cont [14/16] 0.0, 128
        %636 = vxpose.xlu0.b32.cont [15/16] 0.0, 128
        %637 = vxpose.xlu0.b32.end [16/16] 0.0, 128
        %v638 = vpop.trf.xlu0
        %v639 = vpop.trf.xlu0
        %v640 = vpop.trf.xlu0
        %v641 = vpop.trf.xlu0
        %v642 = vpop.trf.xlu0
        %v643 = vpop.trf.xlu0
        %v644 = vpop.trf.xlu0
        %v645 = vpop.trf.xlu0
        %v646 = vpop.trf.xlu0
        %v647 = vpop.trf.xlu0
        %v648 = vpop.trf.xlu0
        %v649 = vpop.trf.xlu0
        %v650 = vpop.trf.xlu0
        %v651 = vpop.trf.xlu0
        %v652 = vpop.trf.xlu0
        %v653 = vpop.trf.xlu0
        %v655 = vsel %vm364, %v638, 0
        %657 = vmatpush.msra.mxu0 0.0
        %658 = vmatpush.msra.mxu0 0.0
        %659 = vmatpush.msra.mxu0 0.0
        %660 = vmatpush.msra.mxu0 0.0
        %661 = vmatpush.msra.mxu0 0.0
        %662 = vmatpush.msra.mxu0 0.0
        %663 = vmatpush.msra.mxu0 0.0
        %664 = vmatpush.msra.mxu0 0.0
        %665 = vmatpush.msra.mxu0 0.0
        %666 = vmatpush.msra.mxu0 0.0
        %667 = vmatpush.msra.mxu0 0.0
        %668 = vmatpush.msra.mxu0 0.0
        %669 = vmatpush.msra.mxu0 0.0
        %670 = vmatpush.msra.mxu0 0.0
        %671 = vmatpush.msra.mxu0 0.0
        %672 = vmatpush.msra.mxu0 %v362
        %673 = vmatmul.f32.gmra.mxu0 %v655
        %v674 = vpop.f32.mrf.mxu0
        %v675 = vadd.f32 0.0, %v674
        %676 = vdwg.mxu0
        %vm677 = vcmask 62464
        %678 = vst.msk [vmem:[%s334] sm:$0x3f] %vm677, %v675
        %p679 = scmp.lt.s32.totalorder %s20, 1
        %s680 = scalar_select %p679, %s20, 1
        %s681 = smul.addr %s680, 8
        %s682 = scalar_lea.vmem %s8, %s681
        // Predicated region
        $region57: #{attention_edge_layer.1} parent=51 // pred_check
          %p683 = pneg %p216
        $region58: #{attention_edge_layer.1} parent=51 // pred_check_branch
          %685 = sbr.rel (%p683) target = $region60
        $region59: #{attention_edge_layer.1} parent=51 // pred_region
          _
        $region60: #{attention_edge_layer.1} parent=51 // pred_fallthru
          _
      $region52: #{attention_edge_layer.1} parent=5 // pred_fallthru
        _
      %p686 = scmp.le.s32.totalorder 2, %s15
      // Predicated region
      $region61: #{attention_edge_layer.1} parent=5 // pred_check
        %p687 = pneg %p686
      $region62: #{attention_edge_layer.1} parent=5 // pred_check_branch
        %689 = sbr.rel (%p687) target = $region64
      $region63: #{attention_edge_layer.1} parent=5 // pred_region
        %s690 = ssub.s32 %s15, 2
        // Predicated region
        $region65: #{attention_edge_layer.1} parent=63 // pred_check
          %p691 = pneg %p222
        $region66: #{attention_edge_layer.1} parent=63 // pred_check_branch
          %693 = sbr.rel (%p691) target = $region68
        $region67: #{attention_edge_layer.1} parent=63 // pred_region
          %p694 = scmp.lt.s32.totalorder %s21, 1
          %s695 = scalar_select %p694, %s21, 1
          %s696 = smul.addr %s695, 8
          %s697 = scalar_lea.vmem %s8, %s696
        $region68: #{attention_edge_layer.1} parent=63 // pred_fallthru
          _
      $region64: #{attention_edge_layer.1} parent=5 // pred_fallthru
        _
    $region6: #{attention_edge_layer.1} parent=1 // loop_footer
      %s19 = sadd.s32 1, %s15
    $region7: #{attention_edge_layer.1} parent=1 // loop_footer_branch
      %14 = sbr.rel target = $region3
    $region8: #{attention_edge_layer.1} parent=1 // loop_exit
      _
    %698 = vsyncpa [#allocation3], 1
    %s699 = scalar_lea.sflag [#allocation3], 1
    %700 = vsyncpa %s699, 1

</llo_original>
